<compile_context>
chip_gen: v6e
topology: v6e:2x2x1
jax: 0.10.0
libtpu: 0.0.40
codegen_flags: <defaults>
</compile_context>

<pallas_src>
import functools

import jax
import jax.numpy as jnp
from jax import lax
from jax.experimental import pallas as pl
from jax.experimental.pallas import tpu as pltpu

_INV_SQRT2 = 0.7071067811865476


def _round_up(v, m):
    return (v + m - 1) // m * m


def _mlp_fused_kernel(x_ref, *refs, n_layers, act):
    """refs = (w0, b0, w1, b1, ..., w_{L-1}, b_{L-1}, o_ref).

    x_ref:  (TM, d0_pad)            row tile of the flattened input
    w_li:   (d_li_pad, d_{li+1}_pad) pre-transposed (in, out), zero-padded
    b_li:   (1, d_{li+1}_pad)        zero-padded bias
    o_ref:  (TM, dL_pad)             row tile of the output
    """
    o_ref = refs[-1]
    wb = refs[:-1]

    h = x_ref[...]
    for li in range(n_layers):
        w = wb[2 * li][...]
        b = wb[2 * li + 1][...].astype(jnp.float32)
        # MXU matmul, f32 accumulate; weights already (in, out) -> no transpose.
        y = jnp.dot(h, w, preferred_element_type=jnp.float32) + b
        if act is not None and li < n_layers - 1:
            if act == "gelu":
                # exact GELU: 0.5 * y * (1 + erf(y / sqrt(2)))
                y = 0.5 * y * (1.0 + lax.erf(y * jnp.float32(_INV_SQRT2)))
            elif act == "relu":
                y = jnp.maximum(y, 0.0)
        # keep intermediates in the input dtype so the next dot uses the
        # native (e.g. bf16) MXU path; f32 inputs stay f32.
        h = y.astype(x_ref.dtype) if li < n_layers - 1 else y

    o_ref[...] = h.astype(o_ref.dtype)


def init_mlp_params(key, in_dim, out_dim, hidden_list, dtype=jnp.float32):
    """Deterministic init mimicking nn.Linear's uniform(-1/sqrt(fan_in), ...).

    Weights are stored in torch convention W: (out, in); the wrapper
    pre-transposes/pads them once before handing them to the kernel.
    """
    params = []
    lastv = in_dim
    dims = list(hidden_list) + [out_dim]
    for d in dims:
        key, kw, kb = jax.random.split(key, 3)
        bound = 1.0 / jnp.sqrt(jnp.float32(lastv))
        w = jax.random.uniform(kw, (d, lastv), dtype, -bound, bound)
        b = jax.random.uniform(kb, (d,), dtype, -bound, bound)
        params.append((w, b))
        lastv = d
    return params


def mlp_forward(x, params, act="gelu", tile_rows=512):
    """Fused Pallas MLP forward.  x: (..., in_dim) -> (..., out_dim)."""
    if act is not None:
        act = act.lower()
        assert act in ("gelu", "relu"), f"activation {act} is not supported"

    lead_shape = x.shape[:-1]
    in_dim = x.shape[-1]
    x2d = x.reshape(-1, in_dim)
    n = x2d.shape[0]
    n_layers = len(params)
    itemsize = jnp.dtype(x.dtype).itemsize

    # true and lane-padded feature dims per layer boundary
    dims = [in_dim] + [w.shape[0] for (w, _) in params]
    pdims = [_round_up(d, 128) for d in dims]

    # row tile: multiple of 8, no larger than needed; rows padded to a multiple
    # of the tile so every grid step sees a full (8,128)-aligned block.
    tm = min(_round_up(max(tile_rows, 8), 8), _round_up(n, 8))
    n_pad = _round_up(n, tm)

    # pad input rows/cols with zeros (zero cols propagate as exact zeros
    # through matmul + bias(0) + gelu(0)=0, so results are unchanged)
    x_pad = x2d
    if n_pad != n or pdims[0] != in_dim:
        x_pad = jnp.pad(x2d, ((0, n_pad - n), (0, pdims[0] - in_dim)))

    # pre-transpose (out,in) -> (in,out) and zero-pad weights/biases once,
    # outside the kernel: the MXU consumes them directly, no in-kernel w.T.
    flat_wb = []
    in_specs = [pl.BlockSpec((tm, pdims[0]), lambda i: (i, 0))]
    for li, (w, b) in enumerate(params):
        d_in_p, d_out_p = pdims[li], pdims[li + 1]
        wt = jnp.pad(w.T, ((0, d_in_p - w.shape[1]), (0, d_out_p - w.shape[0])))
        bp = jnp.pad(b.reshape(1, -1), ((0, 0), (0, d_out_p - b.shape[0])))
        flat_wb += [wt.astype(x.dtype), bp.astype(x.dtype)]
        in_specs += [
            pl.BlockSpec((d_in_p, d_out_p), lambda i: (0, 0)),  # resident weights
            pl.BlockSpec((1, d_out_p), lambda i: (0, 0)),       # resident bias
        ]

    # VMEM budget: double-buffered row tiles + resident weights + f32 temps.
    weights_bytes = sum(
        (pdims[i] * pdims[i + 1] + pdims[i + 1]) * itemsize for i in range(n_layers)
    )
    tiles_bytes = 2 * 2 * tm * (pdims[0] + pdims[-1]) * itemsize
    interm_bytes = 2 * tm * max(pdims) * 4
    vmem_limit = int(
        min(max(4 * (tiles_bytes + weights_bytes + interm_bytes), 16 * 2**20),
            32 * 2**20)
    )

    # advisory cost estimate for XLA's scheduler
    flops = int(sum(2 * n * dims[i] * dims[i + 1] for i in range(n_layers)))
    transcendentals = (
        int(n * sum(dims[1:-1])) if (act == "gelu" and n_layers > 1) else 0
    )
    bytes_accessed = int(
        itemsize
        * (n * dims[0] + n * dims[-1]
           + sum(dims[i] * dims[i + 1] + dims[i + 1] for i in range(n_layers)))
    )

    kernel = functools.partial(_mlp_fused_kernel, n_layers=n_layers, act=act)

    out_pad = pl.pallas_call(
        kernel,
        out_shape=jax.ShapeDtypeStruct((n_pad, pdims[-1]), x.dtype),
        grid_spec=pltpu.PrefetchScalarGridSpec(
            num_scalar_prefetch=0,
            grid=(pl.cdiv(n_pad, tm),),
            in_specs=in_specs,
            out_specs=pl.BlockSpec((tm, pdims[-1]), lambda i: (i, 0)),
        ),
        compiler_params=pltpu.CompilerParams(
            dimension_semantics=("parallel",),
            vmem_limit_bytes=vmem_limit,
        ),
        cost_estimate=pl.CostEstimate(
            flops=flops,
            transcendentals=transcendentals,
            bytes_accessed=bytes_accessed,
        ),
    )(x_pad, *flat_wb)

    out = out_pad[:n, : dims[-1]]
    return out.reshape(*lead_shape, dims[-1])


if __name__ == "__main__":
    key = jax.random.PRNGKey(0)
    kx, kp = jax.random.split(key)

    # small shapes: batch=2, seq=8, in_dim=16, hidden=[32, 32], out_dim=4
    in_dim, out_dim, hidden_list = 16, 4, [32, 32]
    x = jax.random.normal(kx, (2, 8, in_dim), jnp.float32)

    params = init_mlp_params(kp, in_dim, out_dim, hidden_list)

    # tile_rows=8 so the tiny example still exercises a multi-step row grid
    out = mlp_forward(x, params, act="gelu", tile_rows=8)
    jax.block_until_ready(out)

    # sanity-check against a pure-JAX reference of the same math
    def ref(x, params):
        y = x.reshape(-1, x.shape[-1])
        for li, (w, b) in enumerate(params):
            y = y @ w.T + b
            if li < len(params) - 1:
                y = 0.5 * y * (1.0 + lax.erf(y / jnp.sqrt(2.0)))
        return y.reshape(*x.shape[:-1], -1)

    ref_out = ref(x, params)
    assert out.shape == (2, 8, out_dim), out.shape
    assert jnp.allclose(out, ref_out, atol=1e-5, rtol=1e-5), (
        float(jnp.max(jnp.abs(out - ref_out)))
    )

    print("KERNEL_OK")
</pallas_src>

<mosaic_0001>
module attributes {stable_mosaic.version = 11 : i64} {
  func.func @_mlp_fused_kernel(%arg0: i32, %arg1: memref<8x128xf32, #tpu.memory_space<vmem>>, %arg2: memref<128x128xf32, #tpu.memory_space<vmem>>, %arg3: memref<1x128xf32, #tpu.memory_space<vmem>>, %arg4: memref<128x128xf32, #tpu.memory_space<vmem>>, %arg5: memref<1x128xf32, #tpu.memory_space<vmem>>, %arg6: memref<128x128xf32, #tpu.memory_space<vmem>>, %arg7: memref<1x128xf32, #tpu.memory_space<vmem>>, %arg8: memref<8x128xf32, #tpu.memory_space<vmem>>) attributes {dimension_semantics = [#tpu.dimension_semantics<parallel>], iteration_bounds = array<i64: 2>, scalar_prefetch = 0 : i64, scratch_operands = 0 : i64, tpu.core_type = #tpu.core_type<tc>, window_params = [{transform_indices = @transform_0, window_bounds = array<i64: 8, 128>}, {pipeline_mode = #tpu.pipeline_mode<synchronous>, transform_indices = @transform_1, window_bounds = array<i64: 128, 128>}, {pipeline_mode = #tpu.pipeline_mode<synchronous>, transform_indices = @transform_2, window_bounds = array<i64: 1, 128>}, {pipeline_mode = #tpu.pipeline_mode<synchronous>, transform_indices = @transform_3, window_bounds = array<i64: 128, 128>}, {pipeline_mode = #tpu.pipeline_mode<synchronous>, transform_indices = @transform_4, window_bounds = array<i64: 1, 128>}, {pipeline_mode = #tpu.pipeline_mode<synchronous>, transform_indices = @transform_5, window_bounds = array<i64: 128, 128>}, {pipeline_mode = #tpu.pipeline_mode<synchronous>, transform_indices = @transform_6, window_bounds = array<i64: 1, 128>}, {transform_indices = @transform_7, window_bounds = array<i64: 8, 128>}]} {
    %c0 = arith.constant 0 : index
    %c0_0 = arith.constant 0 : index
    %0 = vector.load %arg1[%c0, %c0_0] : memref<8x128xf32, #tpu.memory_space<vmem>>, vector<8x128xf32>
    %c0_1 = arith.constant 0 : index
    %c0_2 = arith.constant 0 : index
    %1 = vector.load %arg2[%c0_1, %c0_2] : memref<128x128xf32, #tpu.memory_space<vmem>>, vector<128x128xf32>
    %c0_3 = arith.constant 0 : index
    %c0_4 = arith.constant 0 : index
    %2 = vector.load %arg3[%c0_3, %c0_4] : memref<1x128xf32, #tpu.memory_space<vmem>>, vector<1x128xf32>
    %cst = arith.constant dense<0.000000e+00> : vector<8x128xf32>
    %3 = tpu.matmul %0, %1, %cst {dimension_numbers = #tpu.dot_dimension_numbers<[1], [0], [0], [1], [0, 0, 1, 1], [], []>} : vector<8x128xf32>, vector<128x128xf32>, vector<8x128xf32> -> vector<8x128xf32>
    %4 = vector.broadcast %2 : vector<1x128xf32> to vector<8x128xf32>
    %5 = arith.addf %3, %4 : vector<8x128xf32>
    %cst_5 = arith.constant 5.000000e-01 : f32
    %6 = vector.broadcast %cst_5 : f32 to vector<8x128xf32>
    %7 = arith.mulf %6, %5 : vector<8x128xf32>
    %cst_6 = arith.constant 0.707106769 : f32
    %8 = vector.broadcast %cst_6 : f32 to vector<8x128xf32>
    %9 = arith.mulf %5, %8 : vector<8x128xf32>
    %10 = math.erf %9 : vector<8x128xf32>
    %cst_7 = arith.constant 1.000000e+00 : f32
    %11 = vector.broadcast %cst_7 : f32 to vector<8x128xf32>
    %12 = arith.addf %11, %10 : vector<8x128xf32>
    %13 = arith.mulf %7, %12 : vector<8x128xf32>
    %c0_8 = arith.constant 0 : index
    %c0_9 = arith.constant 0 : index
    %14 = vector.load %arg4[%c0_8, %c0_9] : memref<128x128xf32, #tpu.memory_space<vmem>>, vector<128x128xf32>
    %c0_10 = arith.constant 0 : index
    %c0_11 = arith.constant 0 : index
    %15 = vector.load %arg5[%c0_10, %c0_11] : memref<1x128xf32, #tpu.memory_space<vmem>>, vector<1x128xf32>
    %cst_12 = arith.constant dense<0.000000e+00> : vector<8x128xf32>
    %16 = tpu.matmul %13, %14, %cst_12 {dimension_numbers = #tpu.dot_dimension_numbers<[1], [0], [0], [1], [0, 0, 1, 1], [], []>} : vector<8x128xf32>, vector<128x128xf32>, vector<8x128xf32> -> vector<8x128xf32>
    %17 = vector.broadcast %15 : vector<1x128xf32> to vector<8x128xf32>
    %18 = arith.addf %16, %17 : vector<8x128xf32>
    %cst_13 = arith.constant 5.000000e-01 : f32
    %19 = vector.broadcast %cst_13 : f32 to vector<8x128xf32>
    %20 = arith.mulf %19, %18 : vector<8x128xf32>
    %cst_14 = arith.constant 0.707106769 : f32
    %21 = vector.broadcast %cst_14 : f32 to vector<8x128xf32>
    %22 = arith.mulf %18, %21 : vector<8x128xf32>
    %23 = math.erf %22 : vector<8x128xf32>
    %cst_15 = arith.constant 1.000000e+00 : f32
    %24 = vector.broadcast %cst_15 : f32 to vector<8x128xf32>
    %25 = arith.addf %24, %23 : vector<8x128xf32>
    %26 = arith.mulf %20, %25 : vector<8x128xf32>
    %c0_16 = arith.constant 0 : index
    %c0_17 = arith.constant 0 : index
    %27 = vector.load %arg6[%c0_16, %c0_17] : memref<128x128xf32, #tpu.memory_space<vmem>>, vector<128x128xf32>
    %c0_18 = arith.constant 0 : index
    %c0_19 = arith.constant 0 : index
    %28 = vector.load %arg7[%c0_18, %c0_19] : memref<1x128xf32, #tpu.memory_space<vmem>>, vector<1x128xf32>
    %cst_20 = arith.constant dense<0.000000e+00> : vector<8x128xf32>
    %29 = tpu.matmul %26, %27, %cst_20 {dimension_numbers = #tpu.dot_dimension_numbers<[1], [0], [0], [1], [0, 0, 1, 1], [], []>} : vector<8x128xf32>, vector<128x128xf32>, vector<8x128xf32> -> vector<8x128xf32>
    %30 = vector.broadcast %28 : vector<1x128xf32> to vector<8x128xf32>
    %31 = arith.addf %29, %30 : vector<8x128xf32>
    %c0_21 = arith.constant 0 : index
    %c0_22 = arith.constant 0 : index
    %32 = vector.load %arg8[%c0_21, %c0_22] : memref<8x128xf32, #tpu.memory_space<vmem>>, vector<8x128xf32>
    tpu.vector_store %arg8[%c0_21, %c0_22], %31 {strides = array<i32>} : memref<8x128xf32, #tpu.memory_space<vmem>>, vector<8x128xf32>,
    return
  }
  func.func @transform_0(%arg0: i32) -> (i32, i32) {
    %c0_i32 = arith.constant 0 : i32
    %c0_i32_0 = arith.constant 0 : i32
    return %arg0, %c0_i32 : i32, i32
  }
  func.func @transform_1(%arg0: i32) -> (i32, i32) {
    %c0_i32 = arith.constant 0 : i32
    %c0_i32_0 = arith.constant 0 : i32
    %c0_i32_1 = arith.constant 0 : i32
    return %c0_i32, %c0_i32_0 : i32, i32
  }
  func.func @transform_2(%arg0: i32) -> (i32, i32) {
    %c0_i32 = arith.constant 0 : i32
    %c0_i32_0 = arith.constant 0 : i32
    %c0_i32_1 = arith.constant 0 : i32
    return %c0_i32, %c0_i32_0 : i32, i32
  }
  func.func @transform_3(%arg0: i32) -> (i32, i32) {
    %c0_i32 = arith.constant 0 : i32
    %c0_i32_0 = arith.constant 0 : i32
    %c0_i32_1 = arith.constant 0 : i32
    return %c0_i32, %c0_i32_0 : i32, i32
  }
  func.func @transform_4(%arg0: i32) -> (i32, i32) {
    %c0_i32 = arith.constant 0 : i32
    %c0_i32_0 = arith.constant 0 : i32
    %c0_i32_1 = arith.constant 0 : i32
    return %c0_i32, %c0_i32_0 : i32, i32
  }
  func.func @transform_5(%arg0: i32) -> (i32, i32) {
    %c0_i32 = arith.constant 0 : i32
    %c0_i32_0 = arith.constant 0 : i32
    %c0_i32_1 = arith.constant 0 : i32
    return %c0_i32, %c0_i32_0 : i32, i32
  }
  func.func @transform_6(%arg0: i32) -> (i32, i32) {
    %c0_i32 = arith.constant 0 : i32
    %c0_i32_0 = arith.constant 0 : i32
    %c0_i32_1 = arith.constant 0 : i32
    return %c0_i32, %c0_i32_0 : i32, i32
  }
  func.func @transform_7(%arg0: i32) -> (i32, i32) {
    %c0_i32 = arith.constant 0 : i32
    %c0_i32_0 = arith.constant 0 : i32
    return %arg0, %c0_i32 : i32, i32
  }
}

</mosaic_0001>

<llo_original>
// kernel: tpu_custom_call.1
$region0: #{tpu_custom_call.1}
  #allocation0 [shape = 'u32[]', space=smem, size = 0x4, offset = 0x4, fixed_abs, tag = 'smem constant byte address 0x4 - core index']
  #allocation1 [shape = 'u32[144,128]{1,0:T(1,128)}', space=vmem, size = 0x12000, scoped, tag = 'internal scratch']
  %s0 = inlined_call_operand.hbm [shape: f32[16,128], index: 0, kind: input, shape index: {}]
  %s1 = inlined_call_operand.hbm [shape: f32[128,128], index: 1, kind: input, shape index: {}]
  %s2 = inlined_call_operand.vmem [shape: f32[1,128], index: 2, kind: input, shape index: {}]
  %s3 = inlined_call_operand.hbm [shape: f32[128,128], index: 3, kind: input, shape index: {}]
  %s4 = inlined_call_operand.vmem [shape: f32[1,128], index: 4, kind: input, shape index: {}]
  %s5 = inlined_call_operand.hbm [shape: f32[128,128], index: 5, kind: input, shape index: {}]
  %s6 = inlined_call_operand.vmem [shape: f32[1,128], index: 6, kind: input, shape index: {}]
  %s7 = inlined_call_operand.hbm [shape: f32[16,128], index: 7, kind: output, shape index: {}]
  %s8 = sld [smem:[#allocation0]]
  $region77: #{tpu_custom_call.1} parent=0
    _
  %s10 = ssub.s32 1, %s8
  %s11 = scalar_select 0, %s10, %s8
  $region1: #{tpu_custom_call.1} parent=0
    #allocation2 [shape = 'u8[8192]{0}', space=vmem, size = 0x2000, scoped, tag = 'input window, operand 0']
    #allocation3 [shape = 's32[2]{0}', space=sflag, size = 0x8, scoped, tag = 'scoped memory for tpu_custom_call.1']
    #allocation4 [shape = 's32[2]{0}', space=sflag, size = 0x8, scoped, tag = 'scoped memory for tpu_custom_call.1']
    #allocation5 [shape = 'u8[65536]{0}', space=vmem, size = 0x10000, scoped, tag = 'input window, operand 1, single buffered']
    #allocation6 [shape = 's32[1]{0}', space=sflag, size = 0x4, scoped, tag = 'scoped memory for tpu_custom_call.1']
    #allocation7 [shape = 'u8[65536]{0}', space=vmem, size = 0x10000, scoped, tag = 'input window, operand 3, single buffered']
    #allocation8 [shape = 'u8[65536]{0}', space=vmem, size = 0x10000, scoped, tag = 'input window, operand 5, single buffered']
    #allocation9 [shape = 's32[1]{0}', space=sflag, size = 0x4, scoped, tag = 'scoped memory for tpu_custom_call.1']
    #allocation10 [shape = 'u8[8192]{0}', space=vmem, size = 0x2000, scoped, tag = 'output window, operand 0']
    %12 = vsyncpa [#allocation3], 0
    %s13 = scalar_lea.sflag [#allocation3], 1
    %14 = vsyncpa %s13, 0
    %15 = vsyncpa [#allocation6], 0
    %16 = vsyncpa [#allocation9], 0
    %17 = vsyncpa [#allocation4], 0
    %s18 = scalar_lea.sflag [#allocation4], 1
    %19 = vsyncpa %s18, 0
    loop: start=0, step=1, limit=4
    $region2: #{tpu_custom_call.1} parent=1 // loop_pre_header
      _
    $region3: #{tpu_custom_call.1} parent=1 // loop_header
      %s21 = sphi 0, %s25
      %p22 = scmp.ge.s32.totalorder %s21, 4
      %s31 = sphi 0, %s33
      %s34 = sphi 0, %s31
      %s35 = sphi 0, %s34
      %s51 = sphi 0, %s35
      %s55 = sphi 0, %s55
      %s57 = sphi 0, %s55
      %s58 = sphi 0, %s57
      %s72 = sphi 0, %s58
      %s76 = sphi 0, %s76
      %s78 = sphi 0, %s76
      %s79 = sphi 0, %s78
      %s93 = sphi 0, %s79
      %s97 = sphi 0, %s97
      %s99 = sphi 0, %s97
      %s100 = sphi 0, %s99
      %s114 = sphi 0, %s100
      %s118 = sphi 0, %s118
      %s120 = sphi 0, %s118
      %s121 = sphi 0, %s120
      %s135 = sphi 0, %s121
      %s139 = sphi 0, %s139
      %s141 = sphi 0, %s139
      %s142 = sphi 0, %s141
      %s156 = sphi 0, %s142
      %s160 = sphi 0, %s160
      %s162 = sphi 0, %s160
      %s163 = sphi 0, %s162
      %s177 = sphi 0, %s163
      %s183 = sphi 0, %s185
      %s186 = sphi 0, %s183
      %s187 = sphi 0, %s186
      %s203 = sphi 0, %s187
    $region4: #{tpu_custom_call.1} parent=1 // loop_header_branch
      %24 = sbr.rel (%p22) target = $region8
    $region5: #{tpu_custom_call.1} parent=1 // loop_body
      %s26 = ssub.s32 %s21, 1
      %s27 = ssub.s32 %s21, 2
      %s28 = sadd.s32 %s21, 1
      %s29 = ssub.s32 %s21, %s28
      %p30 = scmp.eq.s32.totalorder %s29, 0
      %s32 = sadd.s32 %s31, 1
      %s33 = scalar_select %p30, %s31, %s32
      %p36 = pneg %p30
      %p37 = scmp.eq.s32.totalorder %s21, 1
      %p38 = por %p36, %p37
      %p39 = scmp.ne.s32.totalorder %s31, %s34
      %p40 = scmp.eq.s32.totalorder %s21, 0
      %p41 = por %p39, %p40
      %p42 = scmp.ne.s32.totalorder %s31, %s34
      %p43 = scmp.eq.s32.totalorder %s26, 1
      %p44 = por %p42, %p43
      %p45 = scmp.ne.s32.totalorder %s34, %s35
      %p46 = scmp.eq.s32.totalorder %s26, 0
      %p47 = por %p45, %p46
      %p48 = scmp.ne.s32.totalorder %s34, %s35
      %p49 = scmp.eq.s32.totalorder %s27, 1
      %p50 = por %p48, %p49
      %p52 = scmp.ne.s32.totalorder %s35, %s51
      %p53 = scmp.eq.s32.totalorder %s27, 0
      %p54 = por %p52, %p53
      %s56 = sadd.s32 %s55, 1
      %p59 = scmp.eq.s32.totalorder %s21, 1
      %p60 = scmp.ne.s32.totalorder %s55, %s57
      %p61 = scmp.eq.s32.totalorder %s21, 0
      %p62 = por %p60, %p61
      %p63 = scmp.ne.s32.totalorder %s55, %s57
      %p64 = scmp.eq.s32.totalorder %s26, 1
      %p65 = por %p63, %p64
      %p66 = scmp.ne.s32.totalorder %s57, %s58
      %p67 = scmp.eq.s32.totalorder %s26, 0
      %p68 = por %p66, %p67
      %p69 = scmp.ne.s32.totalorder %s57, %s58
      %p70 = scmp.eq.s32.totalorder %s27, 1
      %p71 = por %p69, %p70
      %p73 = scmp.ne.s32.totalorder %s58, %s72
      %p74 = scmp.eq.s32.totalorder %s27, 0
      %p75 = por %p73, %p74
      %s77 = sadd.s32 %s76, 1
      %p80 = scmp.eq.s32.totalorder %s21, 1
      %p81 = scmp.ne.s32.totalorder %s76, %s78
      %p82 = scmp.eq.s32.totalorder %s21, 0
      %p83 = por %p81, %p82
      %p84 = scmp.ne.s32.totalorder %s76, %s78
      %p85 = scmp.eq.s32.totalorder %s26, 1
      %p86 = por %p84, %p85
      %p87 = scmp.ne.s32.totalorder %s78, %s79
      %p88 = scmp.eq.s32.totalorder %s26, 0
      %p89 = por %p87, %p88
      %p90 = scmp.ne.s32.totalorder %s78, %s79
      %p91 = scmp.eq.s32.totalorder %s27, 1
      %p92 = por %p90, %p91
      %p94 = scmp.ne.s32.totalorder %s79, %s93
      %p95 = scmp.eq.s32.totalorder %s27, 0
      %p96 = por %p94, %p95
      %s98 = sadd.s32 %s97, 1
      %p101 = scmp.eq.s32.totalorder %s21, 1
      %p102 = scmp.ne.s32.totalorder %s97, %s99
      %p103 = scmp.eq.s32.totalorder %s21, 0
      %p104 = por %p102, %p103
      %p105 = scmp.ne.s32.totalorder %s97, %s99
      %p106 = scmp.eq.s32.totalorder %s26, 1
      %p107 = por %p105, %p106
      %p108 = scmp.ne.s32.totalorder %s99, %s100
      %p109 = scmp.eq.s32.totalorder %s26, 0
      %p110 = por %p108, %p109
      %p111 = scmp.ne.s32.totalorder %s99, %s100
      %p112 = scmp.eq.s32.totalorder %s27, 1
      %p113 = por %p111, %p112
      %p115 = scmp.ne.s32.totalorder %s100, %s114
      %p116 = scmp.eq.s32.totalorder %s27, 0
      %p117 = por %p115, %p116
      %s119 = sadd.s32 %s118, 1
      %p122 = scmp.eq.s32.totalorder %s21, 1
      %p123 = scmp.ne.s32.totalorder %s118, %s120
      %p124 = scmp.eq.s32.totalorder %s21, 0
      %p125 = por %p123, %p124
      %p126 = scmp.ne.s32.totalorder %s118, %s120
      %p127 = scmp.eq.s32.totalorder %s26, 1
      %p128 = por %p126, %p127
      %p129 = scmp.ne.s32.totalorder %s120, %s121
      %p130 = scmp.eq.s32.totalorder %s26, 0
      %p131 = por %p129, %p130
      %p132 = scmp.ne.s32.totalorder %s120, %s121
      %p133 = scmp.eq.s32.totalorder %s27, 1
      %p134 = por %p132, %p133
      %p136 = scmp.ne.s32.totalorder %s121, %s135
      %p137 = scmp.eq.s32.totalorder %s27, 0
      %p138 = por %p136, %p137
      %s140 = sadd.s32 %s139, 1
      %p143 = scmp.eq.s32.totalorder %s21, 1
      %p144 = scmp.ne.s32.totalorder %s139, %s141
      %p145 = scmp.eq.s32.totalorder %s21, 0
      %p146 = por %p144, %p145
      %p147 = scmp.ne.s32.totalorder %s139, %s141
      %p148 = scmp.eq.s32.totalorder %s26, 1
      %p149 = por %p147, %p148
      %p150 = scmp.ne.s32.totalorder %s141, %s142
      %p151 = scmp.eq.s32.totalorder %s26, 0
      %p152 = por %p150, %p151
      %p153 = scmp.ne.s32.totalorder %s141, %s142
      %p154 = scmp.eq.s32.totalorder %s27, 1
      %p155 = por %p153, %p154
      %p157 = scmp.ne.s32.totalorder %s142, %s156
      %p158 = scmp.eq.s32.totalorder %s27, 0
      %p159 = por %p157, %p158
      %s161 = sadd.s32 %s160, 1
      %p164 = scmp.eq.s32.totalorder %s21, 1
      %p165 = scmp.ne.s32.totalorder %s160, %s162
      %p166 = scmp.eq.s32.totalorder %s21, 0
      %p167 = por %p165, %p166
      %p168 = scmp.ne.s32.totalorder %s160, %s162
      %p169 = scmp.eq.s32.totalorder %s26, 1
      %p170 = por %p168, %p169
      %p171 = scmp.ne.s32.totalorder %s162, %s163
      %p172 = scmp.eq.s32.totalorder %s26, 0
      %p173 = por %p171, %p172
      %p174 = scmp.ne.s32.totalorder %s162, %s163
      %p175 = scmp.eq.s32.totalorder %s27, 1
      %p176 = por %p174, %p175
      %p178 = scmp.ne.s32.totalorder %s163, %s177
      %p179 = scmp.eq.s32.totalorder %s27, 0
      %p180 = por %p178, %p179
      %s181 = ssub.s32 %s21, %s28
      %p182 = scmp.eq.s32.totalorder %s181, 0
      %s184 = sadd.s32 %s183, 1
      %s185 = scalar_select %p182, %s183, %s184
      %p188 = pneg %p182
      %p189 = scmp.eq.s32.totalorder %s21, 1
      %p190 = por %p188, %p189
      %p191 = scmp.ne.s32.totalorder %s183, %s186
      %p192 = scmp.eq.s32.totalorder %s21, 0
      %p193 = por %p191, %p192
      %p194 = scmp.ne.s32.totalorder %s183, %s186
      %p195 = scmp.eq.s32.totalorder %s26, 1
      %p196 = por %p194, %p195
      %p197 = scmp.ne.s32.totalorder %s186, %s187
      %p198 = scmp.eq.s32.totalorder %s26, 0
      %p199 = por %p197, %p198
      %p200 = scmp.ne.s32.totalorder %s186, %s187
      %p201 = scmp.eq.s32.totalorder %s27, 1
      %p202 = por %p200, %p201
      %p204 = scmp.ne.s32.totalorder %s187, %s203
      %p205 = scmp.eq.s32.totalorder %s27, 0
      %p206 = por %p204, %p205
      %p207 = scmp.le.s32.totalorder 1, %s21
      %p208 = scmp.lt.s32.totalorder %s21, 3
      %p209 = pnand %p207, %p208
      %p210 = pneg %p209
      // Predicated region
      $region9: #{tpu_custom_call.1} parent=5 // pred_check
        _
      $region10: #{tpu_custom_call.1} parent=5 // pred_check_branch
        %212 = sbr.rel (%p209) target = $region12
      $region11: #{tpu_custom_call.1} parent=5 // pred_region
        %s213 = ssub.s32 %s21, 1
        // Predicated region
        $region13: #{tpu_custom_call.1} parent=11 // pred_check
          %p214 = pneg %p68
        $region14: #{tpu_custom_call.1} parent=11 // pred_check_branch
          %216 = sbr.rel (%p214) target = $region16
        $region15: #{tpu_custom_call.1} parent=11 // pred_region
          %s218 = ssub.s32 2048, 2048
          %219 = vsyncadd [#allocation6], %s218
          %s220 = sshll.u32 [#allocation5], 4
          %s221 = int_to_ptr.vmem [resolvable:$true] %s220
          %226 = dma.hbm_to_vmem [thread:$0]  %s1, 2048, %s221, [#allocation6], 128, 128, 8
        $region16: #{tpu_custom_call.1} parent=11 // pred_fallthru
          _
        // Predicated region
        $region17: #{tpu_custom_call.1} parent=11 // pred_check
          %p227 = pneg %p89
        $region18: #{tpu_custom_call.1} parent=11 // pred_check_branch
          %229 = sbr.rel (%p227) target = $region20
        $region19: #{tpu_custom_call.1} parent=11 // pred_region
          _
        $region20: #{tpu_custom_call.1} parent=11 // pred_fallthru
          _
        // Predicated region
        $region21: #{tpu_custom_call.1} parent=11 // pred_check
          %p230 = pneg %p110
        $region22: #{tpu_custom_call.1} parent=11 // pred_check_branch
          %232 = sbr.rel (%p230) target = $region24
        $region23: #{tpu_custom_call.1} parent=11 // pred_region
          %s234 = ssub.s32 2048, 2048
          %235 = vsyncadd [#allocation6], %s234
          %s236 = sshll.u32 [#allocation7], 4
          %s237 = int_to_ptr.vmem [resolvable:$true] %s236
          %242 = dma.hbm_to_vmem [thread:$0]  %s3, 2048, %s237, [#allocation6], 128, 128, 8
        $region24: #{tpu_custom_call.1} parent=11 // pred_fallthru
          _
        // Predicated region
        $region25: #{tpu_custom_call.1} parent=11 // pred_check
          %p243 = pneg %p131
        $region26: #{tpu_custom_call.1} parent=11 // pred_check_branch
          %245 = sbr.rel (%p243) target = $region28
        $region27: #{tpu_custom_call.1} parent=11 // pred_region
          _
        $region28: #{tpu_custom_call.1} parent=11 // pred_fallthru
          _
        // Predicated region
        $region29: #{tpu_custom_call.1} parent=11 // pred_check
          %p246 = pneg %p152
        $region30: #{tpu_custom_call.1} parent=11 // pred_check_branch
          %248 = sbr.rel (%p246) target = $region32
        $region31: #{tpu_custom_call.1} parent=11 // pred_region
          %s250 = ssub.s32 2048, 2048
          %251 = vsyncadd [#allocation9], %s250
          %s252 = sshll.u32 [#allocation8], 4
          %s253 = int_to_ptr.vmem [resolvable:$true] %s252
          %258 = dma.hbm_to_vmem [thread:$0]  %s5, 2048, %s253, [#allocation9], 128, 128, 8
        $region32: #{tpu_custom_call.1} parent=11 // pred_fallthru
          _
        // Predicated region
        $region33: #{tpu_custom_call.1} parent=11 // pred_check
          %p259 = pneg %p173
        $region34: #{tpu_custom_call.1} parent=11 // pred_check_branch
          %261 = sbr.rel (%p259) target = $region36
        $region35: #{tpu_custom_call.1} parent=11 // pred_region
          _
        $region36: #{tpu_custom_call.1} parent=11 // pred_fallthru
          _
      $region12: #{tpu_custom_call.1} parent=5 // pred_fallthru
        _
      %p262 = scmp.lt.s32.totalorder %s21, 2
      // Predicated region
      $region37: #{tpu_custom_call.1} parent=5 // pred_check
        %p263 = pneg %p262
      $region38: #{tpu_custom_call.1} parent=5 // pred_check_branch
        %265 = sbr.rel (%p263) target = $region40
      $region39: #{tpu_custom_call.1} parent=5 // pred_region
        // Predicated region
        $region41: #{tpu_custom_call.1} parent=39 // pred_check
          %p266 = pneg %p41
        $region42: #{tpu_custom_call.1} parent=39 // pred_check_branch
          %268 = sbr.rel (%p266) target = $region44
        $region43: #{tpu_custom_call.1} parent=39 // pred_region
          %s269 = sand.u32 %s31, 1
          %s270 = scalar_lea.sflag [#allocation3], %s269
          %s271 = sand.u32 %s31, 1
          %s272 = smul.addr %s271, 8
          %s273 = scalar_lea.vmem [#allocation2], %s272
          %s275 = ssub.s32 128, 128
          %276 = vsyncadd %s270, %s275
          %s277 = smul.addr %s21, 128
          %s278 = scalar_lea.hbm %s0, %s277
          %s280 = sshll.u32 %s273, 4
          %s281 = int_to_ptr.vmem [resolvable:$true] %s280
          %283 = dma.hbm_to_vmem [thread:$0]  %s278, 128, %s281, %s270
        $region44: #{tpu_custom_call.1} parent=39 // pred_fallthru
          _
      $region40: #{tpu_custom_call.1} parent=5 // pred_fallthru
        _
      %p284 = scmp.le.s32.totalorder 1, %s21
      %p285 = scmp.lt.s32.totalorder %s21, 3
      %p286 = pnand %p284, %p285
      %p287 = pneg %p286
      // Predicated region
      $region45: #{tpu_custom_call.1} parent=5 // pred_check
        _
      $region46: #{tpu_custom_call.1} parent=5 // pred_check_branch
        %289 = sbr.rel (%p286) target = $region48
      $region47: #{tpu_custom_call.1} parent=5 // pred_region
        %s290 = ssub.s32 %s21, 1
        %s291 = sand.u32 %s34, 1
        %s292 = scalar_lea.sflag [#allocation3], %s291
        %s293 = sand.u32 %s34, 1
        %s294 = smul.addr %s293, 8
        %s295 = scalar_lea.vmem [#allocation2], %s294
        // Predicated region
        $region49: #{tpu_custom_call.1} parent=47 // pred_check
          %p296 = pneg %p47
        $region50: #{tpu_custom_call.1} parent=47 // pred_check_branch
          %298 = sbr.rel (%p296) target = $region52
        $region51: #{tpu_custom_call.1} parent=47 // pred_region
          %299 = dma.done %s292, 128
        $region52: #{tpu_custom_call.1} parent=47 // pred_fallthru
          _
        // Predicated region
        $region53: #{tpu_custom_call.1} parent=47 // pred_check
          %p300 = pneg %p68
        $region54: #{tpu_custom_call.1} parent=47 // pred_check_branch
          %302 = sbr.rel (%p300) target = $region56
        $region55: #{tpu_custom_call.1} parent=47 // pred_region
          %303 = dma.done [#allocation6], 2048
        $region56: #{tpu_custom_call.1} parent=47 // pred_fallthru
          _
        // Predicated region
        $region57: #{tpu_custom_call.1} parent=47 // pred_check
          %p304 = pneg %p110
        $region58: #{tpu_custom_call.1} parent=47 // pred_check_branch
          %306 = sbr.rel (%p304) target = $region60
        $region59: #{tpu_custom_call.1} parent=47 // pred_region
          %307 = dma.done [#allocation6], 2048
        $region60: #{tpu_custom_call.1} parent=47 // pred_fallthru
          _
        // Predicated region
        $region61: #{tpu_custom_call.1} parent=47 // pred_check
          %p308 = pneg %p152
        $region62: #{tpu_custom_call.1} parent=47 // pred_check_branch
          %310 = sbr.rel (%p308) target = $region64
        $region63: #{tpu_custom_call.1} parent=47 // pred_region
          %311 = dma.done [#allocation9], 2048
        $region64: #{tpu_custom_call.1} parent=47 // pred_fallthru
          _
        %s312 = sand.u32 %s34, 1
        %s313 = scalar_lea.sflag [#allocation3], %s312
        %s314 = sand.u32 %s34, 1
        %s315 = smul.addr %s314, 8
        %s316 = scalar_lea.vmem [#allocation2], %s315
        %p317 = pneg %p47
        %p318 = pneg %p44
        %p319 = pneg %p68
        %p320 = pneg %p65
        %p321 = pneg %p89
        %p322 = pneg %p86
        %p323 = pneg %p110
        %p324 = pneg %p107
        %p325 = pneg %p131
        %p326 = pneg %p128
        %p327 = pneg %p152
        %p328 = pneg %p149
        %p329 = pneg %p173
        %p330 = pneg %p170
        %p331 = pneg %p199
        %p332 = pneg %p196
        %s333 = sand.u32 %s186, 1
        %s334 = scalar_lea.sflag [#allocation4], %s333
        %s335 = sand.u32 %s186, 1
        %s336 = smul.addr %s335, 8
        %s337 = scalar_lea.vmem [#allocation10], %s336
        %v338 = vld [vmem:[%s295] sm:$0xff]
        %v339 = vld [vmem:[#allocation5] sm:$0xff]
        %v340 = vld [vmem:[#allocation5 + $0x8] sm:$0xff]
        %v341 = vld [vmem:[#allocation5 + $0x10] sm:$0xff]
        %v342 = vld [vmem:[#allocation5 + $0x18] sm:$0xff]
        %v343 = vld [vmem:[#allocation5 + $0x20] sm:$0xff]
        %v344 = vld [vmem:[#allocation5 + $0x28] sm:$0xff]
        %v345 = vld [vmem:[#allocation5 + $0x30] sm:$0xff]
        %v346 = vld [vmem:[#allocation5 + $0x38] sm:$0xff]
        %v347 = vld [vmem:[#allocation5 + $0x40] sm:$0xff]
        %v348 = vld [vmem:[#allocation5 + $0x48] sm:$0xff]
        %v349 = vld [vmem:[#allocation5 + $0x50] sm:$0xff]
        %v350 = vld [vmem:[#allocation5 + $0x58] sm:$0xff]
        %v351 = vld [vmem:[#allocation5 + $0x60] sm:$0xff]
        %v352 = vld [vmem:[#allocation5 + $0x68] sm:$0xff]
        %v353 = vld [vmem:[#allocation5 + $0x70] sm:$0xff]
        %v354 = vld [vmem:[#allocation5 + $0x78] sm:$0xff]
        %v355 = vld [vmem:[%s2] sm:$0x1]
        %v357 = vlaneseq
        %v358 = vshrl.u32 %v357, 7
        %v359 = vsub.s32 0, %v358
        %v360 = vrot.slane %v355, %v359
        %362 = vmatprep.subr.mxu0 0.0
        %363 = vmatpush1.msra.mxu0 %v354
        %364 = vmatprep.subr.mxu0 0.0
        %365 = vmatpush1.msra.mxu0 %v353
        %366 = vmatprep.subr.mxu0 0.0
        %367 = vmatpush1.msra.mxu0 %v352
        %368 = vmatprep.subr.mxu0 0.0
        %369 = vmatpush1.msra.mxu0 %v351
        %370 = vmatprep.subr.mxu0 0.0
        %371 = vmatpush1.msra.mxu0 %v350
        %372 = vmatprep.subr.mxu0 0.0
        %373 = vmatpush1.msra.mxu0 %v349
        %374 = vmatprep.subr.mxu0 0.0
        %375 = vmatpush1.msra.mxu0 %v348
        %376 = vmatprep.subr.mxu0 0.0
        %377 = vmatpush1.msra.mxu0 %v347
        %378 = vmatprep.subr.mxu0 0.0
        %379 = vmatpush1.msra.mxu0 %v346
        %380 = vmatprep.subr.mxu0 0.0
        %381 = vmatpush1.msra.mxu0 %v345
        %382 = vmatprep.subr.mxu0 0.0
        %383 = vmatpush1.msra.mxu0 %v344
        %384 = vmatprep.subr.mxu0 0.0
        %385 = vmatpush1.msra.mxu0 %v343
        %386 = vmatprep.subr.mxu0 0.0
        %387 = vmatpush1.msra.mxu0 %v342
        %388 = vmatprep.subr.mxu0 0.0
        %389 = vmatpush1.msra.mxu0 %v341
        %390 = vmatprep.subr.mxu0 0.0
        %391 = vmatpush1.msra.mxu0 %v340
        %392 = vmatprep.subr.mxu0 0.0
        %393 = vmatpush1.msra.mxu0 %v339
        %394 = vmatprep.subr.mxu0 0.0
        %395 = vmatpush2.msra.mxu0 0.0
        %396 = vmatprep.subr.mxu0 0.0
        %397 = vmatpush2.msra.mxu0 0.0
        %398 = vmatprep.subr.mxu0 0.0
        %399 = vmatpush2.msra.mxu0 0.0
        %400 = vmatprep.subr.mxu0 0.0
        %401 = vmatpush2.msra.mxu0 0.0
        %402 = vmatprep.subr.mxu0 0.0
        %403 = vmatpush2.msra.mxu0 0.0
        %404 = vmatprep.subr.mxu0 0.0
        %405 = vmatpush2.msra.mxu0 0.0
        %406 = vmatprep.subr.mxu0 0.0
        %407 = vmatpush2.msra.mxu0 0.0
        %408 = vmatprep.subr.mxu0 0.0
        %409 = vmatpush2.msra.mxu0 0.0
        %410 = vmatprep.subr.mxu0 0.0
        %411 = vmatpush2.msra.mxu0 0.0
        %412 = vmatprep.subr.mxu0 0.0
        %413 = vmatpush2.msra.mxu0 0.0
        %414 = vmatprep.subr.mxu0 0.0
        %415 = vmatpush2.msra.mxu0 0.0
        %416 = vmatprep.subr.mxu0 0.0
        %417 = vmatpush2.msra.mxu0 0.0
        %418 = vmatprep.subr.mxu0 0.0
        %419 = vmatpush2.msra.mxu0 0.0
        %420 = vmatprep.subr.mxu0 0.0
        %421 = vmatpush2.msra.mxu0 0.0
        %422 = vmatprep.subr.mxu0 0.0
        %423 = vmatpush2.msra.mxu0 0.0
        %424 = vmatprep.subr.mxu0 0.0
        %425 = vmatpush2.msra.mxu0 0.0
        %426 = vmatprep.mubr.f32.mxu0 0.0
        %427 = vmatmul.mubr.f32.gmra.mxu0 %v338
        %v428 = vpop.f32.mrf.mxu0
        %v429 = vadd.f32 %v360, %v428
        %v430 = vpop.f32.mrf.mxu0
        %431 = vdwg.mxu0
        %v432 = vmul.f32 %v429, 0.5
        %v433 = vmul.f32 %v429, 0.70710677
        %v434 = verf.f32.pop %v433
        %v435 = vadd.f32 %v434, 1.0
        %v436 = vmul.f32 %v432, %v435
        %v437 = vld [vmem:[#allocation7] sm:$0xff]
        %v438 = vld [vmem:[#allocation7 + $0x8] sm:$0xff]
        %v439 = vld [vmem:[#allocation7 + $0x10] sm:$0xff]
        %v440 = vld [vmem:[#allocation7 + $0x18] sm:$0xff]
        %v441 = vld [vmem:[#allocation7 + $0x20] sm:$0xff]
        %v442 = vld [vmem:[#allocation7 + $0x28] sm:$0xff]
        %v443 = vld [vmem:[#allocation7 + $0x30] sm:$0xff]
        %v444 = vld [vmem:[#allocation7 + $0x38] sm:$0xff]
        %v445 = vld [vmem:[#allocation7 + $0x40] sm:$0xff]
        %v446 = vld [vmem:[#allocation7 + $0x48] sm:$0xff]
        %v447 = vld [vmem:[#allocation7 + $0x50] sm:$0xff]
        %v448 = vld [vmem:[#allocation7 + $0x58] sm:$0xff]
        %v449 = vld [vmem:[#allocation7 + $0x60] sm:$0xff]
        %v450 = vld [vmem:[#allocation7 + $0x68] sm:$0xff]
        %v451 = vld [vmem:[#allocation7 + $0x70] sm:$0xff]
        %v452 = vld [vmem:[#allocation7 + $0x78] sm:$0xff]
        %v453 = vld [vmem:[%s4] sm:$0x1]
        %v455 = vlaneseq
        %v456 = vshrl.u32 %v455, 7
        %v457 = vsub.s32 0, %v456
        %v458 = vrot.slane %v453, %v457
        %460 = vmatprep.subr.mxu0 0.0
        %461 = vmatpush1.msra.mxu0 %v452
        %462 = vmatprep.subr.mxu0 0.0
        %463 = vmatpush1.msra.mxu0 %v451
        %464 = vmatprep.subr.mxu0 0.0
        %465 = vmatpush1.msra.mxu0 %v450
        %466 = vmatprep.subr.mxu0 0.0
        %467 = vmatpush1.msra.mxu0 %v449
        %468 = vmatprep.subr.mxu0 0.0
        %469 = vmatpush1.msra.mxu0 %v448
        %470 = vmatprep.subr.mxu0 0.0
        %471 = vmatpush1.msra.mxu0 %v447
        %472 = vmatprep.subr.mxu0 0.0
        %473 = vmatpush1.msra.mxu0 %v446
        %474 = vmatprep.subr.mxu0 0.0
        %475 = vmatpush1.msra.mxu0 %v445
        %476 = vmatprep.subr.mxu0 0.0
        %477 = vmatpush1.msra.mxu0 %v444
        %478 = vmatprep.subr.mxu0 0.0
        %479 = vmatpush1.msra.mxu0 %v443
        %480 = vmatprep.subr.mxu0 0.0
        %481 = vmatpush1.msra.mxu0 %v442
        %482 = vmatprep.subr.mxu0 0.0
        %483 = vmatpush1.msra.mxu0 %v441
        %484 = vmatprep.subr.mxu0 0.0
        %485 = vmatpush1.msra.mxu0 %v440
        %486 = vmatprep.subr.mxu0 0.0
        %487 = vmatpush1.msra.mxu0 %v439
        %488 = vmatprep.subr.mxu0 0.0
        %489 = vmatpush1.msra.mxu0 %v438
        %490 = vmatprep.subr.mxu0 0.0
        %491 = vmatpush1.msra.mxu0 %v437
        %492 = vmatprep.subr.mxu0 0.0
        %493 = vmatpush2.msra.mxu0 0.0
        %494 = vmatprep.subr.mxu0 0.0
        %495 = vmatpush2.msra.mxu0 0.0
        %496 = vmatprep.subr.mxu0 0.0
        %497 = vmatpush2.msra.mxu0 0.0
        %498 = vmatprep.subr.mxu0 0.0
        %499 = vmatpush2.msra.mxu0 0.0
        %500 = vmatprep.subr.mxu0 0.0
        %501 = vmatpush2.msra.mxu0 0.0
        %502 = vmatprep.subr.mxu0 0.0
        %503 = vmatpush2.msra.mxu0 0.0
        %504 = vmatprep.subr.mxu0 0.0
        %505 = vmatpush2.msra.mxu0 0.0
        %506 = vmatprep.subr.mxu0 0.0
        %507 = vmatpush2.msra.mxu0 0.0
        %508 = vmatprep.subr.mxu0 0.0
        %509 = vmatpush2.msra.mxu0 0.0
        %510 = vmatprep.subr.mxu0 0.0
        %511 = vmatpush2.msra.mxu0 0.0
        %512 = vmatprep.subr.mxu0 0.0
        %513 = vmatpush2.msra.mxu0 0.0
        %514 = vmatprep.subr.mxu0 0.0
        %515 = vmatpush2.msra.mxu0 0.0
        %516 = vmatprep.subr.mxu0 0.0
        %517 = vmatpush2.msra.mxu0 0.0
        %518 = vmatprep.subr.mxu0 0.0
        %519 = vmatpush2.msra.mxu0 0.0
        %520 = vmatprep.subr.mxu0 0.0
        %521 = vmatpush2.msra.mxu0 0.0
        %522 = vmatprep.subr.mxu0 0.0
        %523 = vmatpush2.msra.mxu0 0.0
        %524 = vmatprep.mubr.f32.mxu0 0.0
        %525 = vmatmul.mubr.f32.gmra.mxu0 %v436
        %v526 = vpop.f32.mrf.mxu0
        %v527 = vadd.f32 %v458, %v526
        %v528 = vpop.f32.mrf.mxu0
        %529 = vdwg.mxu0
        %v530 = vmul.f32 %v527, 0.5
        %v531 = vmul.f32 %v527, 0.70710677
        %v532 = verf.f32.pop %v531
        %v533 = vadd.f32 %v532, 1.0
        %v534 = vmul.f32 %v530, %v533
        %v535 = vld [vmem:[#allocation8] sm:$0xff]
        %v536 = vld [vmem:[#allocation8 + $0x8] sm:$0xff]
        %v537 = vld [vmem:[#allocation8 + $0x10] sm:$0xff]
        %v538 = vld [vmem:[#allocation8 + $0x18] sm:$0xff]
        %v539 = vld [vmem:[#allocation8 + $0x20] sm:$0xff]
        %v540 = vld [vmem:[#allocation8 + $0x28] sm:$0xff]
        %v541 = vld [vmem:[#allocation8 + $0x30] sm:$0xff]
        %v542 = vld [vmem:[#allocation8 + $0x38] sm:$0xff]
        %v543 = vld [vmem:[#allocation8 + $0x40] sm:$0xff]
        %v544 = vld [vmem:[#allocation8 + $0x48] sm:$0xff]
        %v545 = vld [vmem:[#allocation8 + $0x50] sm:$0xff]
        %v546 = vld [vmem:[#allocation8 + $0x58] sm:$0xff]
        %v547 = vld [vmem:[#allocation8 + $0x60] sm:$0xff]
        %v548 = vld [vmem:[#allocation8 + $0x68] sm:$0xff]
        %v549 = vld [vmem:[#allocation8 + $0x70] sm:$0xff]
        %v550 = vld [vmem:[#allocation8 + $0x78] sm:$0xff]
        %v551 = vld [vmem:[%s6] sm:$0x1]
        %v553 = vlaneseq
        %v554 = vshrl.u32 %v553, 7
        %v555 = vsub.s32 0, %v554
        %v556 = vrot.slane %v551, %v555
        %558 = vmatprep.subr.mxu0 0.0
        %559 = vmatpush1.msra.mxu0 %v550
        %560 = vmatprep.subr.mxu0 0.0
        %561 = vmatpush1.msra.mxu0 %v549
        %562 = vmatprep.subr.mxu0 0.0
        %563 = vmatpush1.msra.mxu0 %v548
        %564 = vmatprep.subr.mxu0 0.0
        %565 = vmatpush1.msra.mxu0 %v547
        %566 = vmatprep.subr.mxu0 0.0
        %567 = vmatpush1.msra.mxu0 %v546
        %568 = vmatprep.subr.mxu0 0.0
        %569 = vmatpush1.msra.mxu0 %v545
        %570 = vmatprep.subr.mxu0 0.0
        %571 = vmatpush1.msra.mxu0 %v544
        %572 = vmatprep.subr.mxu0 0.0
        %573 = vmatpush1.msra.mxu0 %v543
        %574 = vmatprep.subr.mxu0 0.0
        %575 = vmatpush1.msra.mxu0 %v542
        %576 = vmatprep.subr.mxu0 0.0
        %577 = vmatpush1.msra.mxu0 %v541
        %578 = vmatprep.subr.mxu0 0.0
        %579 = vmatpush1.msra.mxu0 %v540
        %580 = vmatprep.subr.mxu0 0.0
        %581 = vmatpush1.msra.mxu0 %v539
        %582 = vmatprep.subr.mxu0 0.0
        %583 = vmatpush1.msra.mxu0 %v538
        %584 = vmatprep.subr.mxu0 0.0
        %585 = vmatpush1.msra.mxu0 %v537
        %586 = vmatprep.subr.mxu0 0.0
        %587 = vmatpush1.msra.mxu0 %v536
        %588 = vmatprep.subr.mxu0 0.0
        %589 = vmatpush1.msra.mxu0 %v535
        %590 = vmatprep.subr.mxu0 0.0
        %591 = vmatpush2.msra.mxu0 0.0
        %592 = vmatprep.subr.mxu0 0.0
        %593 = vmatpush2.msra.mxu0 0.0
        %594 = vmatprep.subr.mxu0 0.0
        %595 = vmatpush2.msra.mxu0 0.0
        %596 = vmatprep.subr.mxu0 0.0
        %597 = vmatpush2.msra.mxu0 0.0
        %598 = vmatprep.subr.mxu0 0.0
        %599 = vmatpush2.msra.mxu0 0.0
        %600 = vmatprep.subr.mxu0 0.0
        %601 = vmatpush2.msra.mxu0 0.0
        %602 = vmatprep.subr.mxu0 0.0
        %603 = vmatpush2.msra.mxu0 0.0
        %604 = vmatprep.subr.mxu0 0.0
        %605 = vmatpush2.msra.mxu0 0.0
        %606 = vmatprep.subr.mxu0 0.0
        %607 = vmatpush2.msra.mxu0 0.0
        %608 = vmatprep.subr.mxu0 0.0
        %609 = vmatpush2.msra.mxu0 0.0
        %610 = vmatprep.subr.mxu0 0.0
        %611 = vmatpush2.msra.mxu0 0.0
        %612 = vmatprep.subr.mxu0 0.0
        %613 = vmatpush2.msra.mxu0 0.0
        %614 = vmatprep.subr.mxu0 0.0
        %615 = vmatpush2.msra.mxu0 0.0
        %616 = vmatprep.subr.mxu0 0.0
        %617 = vmatpush2.msra.mxu0 0.0
        %618 = vmatprep.subr.mxu0 0.0
        %619 = vmatpush2.msra.mxu0 0.0
        %620 = vmatprep.subr.mxu0 0.0
        %621 = vmatpush2.msra.mxu0 0.0
        %622 = vmatprep.mubr.f32.mxu0 0.0
        %623 = vmatmul.mubr.f32.gmra.mxu0 %v534
        %v624 = vpop.f32.mrf.mxu0
        %v625 = vadd.f32 %v556, %v624
        %v626 = vpop.f32.mrf.mxu0
        %627 = vdwg.mxu0
        %628 = vst [vmem:[%s337] sm:$0xff] %v625
        %s629 = sand.u32 %s186, 1
        %s630 = scalar_lea.sflag [#allocation4], %s629
        %s631 = sand.u32 %s186, 1
        %s632 = smul.addr %s631, 8
        %s633 = scalar_lea.vmem [#allocation10], %s632
        // Predicated region
        $region65: #{tpu_custom_call.1} parent=47 // pred_check
          %p634 = pneg %p196
        $region66: #{tpu_custom_call.1} parent=47 // pred_check_branch
          %636 = sbr.rel (%p634) target = $region68
        $region67: #{tpu_custom_call.1} parent=47 // pred_region
          %s638 = ssub.s32 128, 128
          %639 = vsyncadd %s630, %s638
          %s640 = smul.addr %s26, 128
          %s641 = scalar_lea.hbm %s7, %s640
          %s643 = sshll.u32 %s633, 4
          %s644 = int_to_ptr.vmem [resolvable:$true] %s643
          %646 = dma.vmem_to_hbm [thread:$0]  %s644, 128, %s641, %s630
        $region68: #{tpu_custom_call.1} parent=47 // pred_fallthru
          _
      $region48: #{tpu_custom_call.1} parent=5 // pred_fallthru
        _
      %p647 = scmp.le.s32.totalorder 2, %s21
      // Predicated region
      $region69: #{tpu_custom_call.1} parent=5 // pred_check
        %p648 = pneg %p647
      $region70: #{tpu_custom_call.1} parent=5 // pred_check_branch
        %650 = sbr.rel (%p648) target = $region72
      $region71: #{tpu_custom_call.1} parent=5 // pred_region
        %s651 = ssub.s32 %s21, 2
        // Predicated region
        $region73: #{tpu_custom_call.1} parent=71 // pred_check
          %p652 = pneg %p202
        $region74: #{tpu_custom_call.1} parent=71 // pred_check_branch
          %654 = sbr.rel (%p652) target = $region76
        $region75: #{tpu_custom_call.1} parent=71 // pred_region
          %s655 = sand.u32 %s187, 1
          %s656 = scalar_lea.sflag [#allocation4], %s655
          %s657 = sand.u32 %s187, 1
          %s658 = smul.addr %s657, 8
          %s659 = scalar_lea.vmem [#allocation10], %s658
          %660 = dma.done %s656, 128
        $region76: #{tpu_custom_call.1} parent=71 // pred_fallthru
          _
      $region72: #{tpu_custom_call.1} parent=5 // pred_fallthru
        _
    $region6: #{tpu_custom_call.1} parent=1 // loop_footer
      %s25 = sadd.s32 1, %s21
    $region7: #{tpu_custom_call.1} parent=1 // loop_footer_branch
      %20 = sbr.rel target = $region3
    $region8: #{tpu_custom_call.1} parent=1 // loop_exit
      _
    %661 = vsyncpa [#allocation3], 1
    %s662 = scalar_lea.sflag [#allocation3], 1
    %663 = vsyncpa %s662, 1
    %664 = vsyncpa [#allocation6], 1
    %665 = vsyncpa [#allocation9], 1
    %666 = vsyncpa [#allocation4], 1
    %s667 = scalar_lea.sflag [#allocation4], 1
    %668 = vsyncpa %s667, 1

</llo_original>
